<compile_context>
chip_gen: v7x
topology: tpu7x:2x2x1
jax: 0.10.0
libtpu: 0.0.40
codegen_flags: <defaults>
</compile_context>

<pallas_src>
import jax
import jax.numpy as jnp
from jax.experimental import pallas as pl
from jax.experimental.pallas import tpu as pltpu  # noqa: F401  (kept for template parity)

TAIL_ROWS = 8   # zero-padded 8-row tile holding the layer-5 row
AUG_PAD = 8     # extra lanes on the contraction axis (ones row + padding)


def polynet_kernel(x_ref, p_ref, o_ref):
    H = (p_ref.shape[0] - TAIL_ROWS) // 4
    Ha = p_ref.shape[1]          # H + AUG_PAD
    B = x_ref.shape[1]
    f32 = jnp.float32
    act = jnp.tanh               # activation_fn

    # Constant pads, built once and reused (compiler folds them).
    ones_row = jnp.ones((1, B), f32)
    hid_pad = jnp.concatenate([ones_row, jnp.zeros((AUG_PAD - 1, B), f32)], axis=0)  # (8, B)

    # ---- Layer 1: x is a lane-dense (1, B) row; bias folded via the ones row.
    # x_aug: row 0 = x, row 1 = 1, rows 2.. = 0   (matches W1_aug cols 0 / 1).
    x_aug = jnp.concatenate(
        [x_ref[...], ones_row, jnp.zeros((Ha - 2, B), f32)], axis=0)          # (Ha, B)
    w1a = p_ref[0:H, :]                                                       # (H, Ha)
    h = act(jnp.dot(w1a, x_aug, preferred_element_type=f32))                  # (H, B)

    # ---- Layers 2-4: one (H, Ha) @ (Ha, B) MXU matmul each, bias in column H.
    for l in range(1, 4):
        w = p_ref[l * H:(l + 1) * H, :]                                       # (H, Ha)
        h_aug = jnp.concatenate([h, hid_pad], axis=0)                         # (Ha, B)
        h = act(jnp.dot(w, h_aug, preferred_element_type=f32))                # (H, B)

    # ---- Layer 5: (8, Ha) @ (Ha, B) (rows 1-7 are zero), keep lane-dense row 0.
    w5a = p_ref[4 * H:4 * H + TAIL_ROWS, :]                                   # (8, Ha)
    h_aug = jnp.concatenate([h, hid_pad], axis=0)
    y8 = jnp.dot(w5a, h_aug, preferred_element_type=f32)                      # (8, B)
    o_ref[...] = y8[0:1, :].astype(o_ref.dtype)                               # (1, B)


def pack_params(params):
    """Pack all weights/biases into one (4H + 8, H + 8) f32 slab (one DMA)."""
    H = params["w2"].shape[0]
    Ha = H + AUG_PAD
    assert H % 8 == 0, "augmented layout requires hidden_dim % 8 == 0 (ideally % 128)"
    assert params["w1"].shape == (1, H), "packed layout assumes input_dim == 1"
    assert params["w5"].shape == (H, 1), "packed layout assumes output_dim == 1"

    def aug_block(w_stored, b_stored, bias_col):
        # w_stored: (in, out)  ->  block (out, Ha) = [w_stored^T | b | 0]
        fan_in, fan_out = w_stored.shape
        blk = jnp.zeros((fan_out, Ha), jnp.float32)
        blk = blk.at[:, :fan_in].set(w_stored.T)
        blk = blk.at[:, bias_col].set(b_stored[0, :])
        return blk

    blocks = [
        aug_block(params["w1"], params["b1"], bias_col=1),   # (H, Ha)
        aug_block(params["w2"], params["b2"], bias_col=H),
        aug_block(params["w3"], params["b3"], bias_col=H),
        aug_block(params["w4"], params["b4"], bias_col=H),
    ]
    tail = jnp.zeros((TAIL_ROWS, Ha), jnp.float32)
    tail = tail.at[0, :H].set(params["w5"][:, 0])
    tail = tail.at[0, H].set(params["b5"][0, 0])
    blocks.append(tail)
    return jnp.concatenate(blocks, axis=0)                   # (4H + 8, Ha)


def polynet_forward(x, packed):
    """x: (B, 1) f32.  packed: (4H + 8, H + 8) f32 param slab.  Returns (B, 1) f32."""
    B = x.shape[0]
    x_row = x.reshape(1, B)   # lane-dense input row (B on the lane axis)

    # Tiny footprint (~24 KiB total): full-array blocks resident in VMEM, no grid,
    # param slab DMA'd exactly once.
    # TODO(synk): the kernel is dispatch-bound at 64x32 — to move wall-clock, fuse
    # more work per call (whole training step forward+loss, many batches / param
    # candidates via a leading grid axis marked "parallel" to also use v7x's 2nd
    # TensorCore) and pad the batch to a multiple of 128 lanes once it grows.
    x_spec = pl.BlockSpec((1, B), lambda: (0, 0))
    p_spec = pl.BlockSpec(packed.shape, lambda: (0, 0))
    o_spec = pl.BlockSpec((1, B), lambda: (0, 0))

    y_row = pl.pallas_call(
        polynet_kernel,
        out_shape=jax.ShapeDtypeStruct((1, B), jnp.float32),
        grid=(),
        in_specs=[x_spec, p_spec],
        out_specs=o_spec,
    )(x_row, packed)
    return y_row.reshape(B, 1)


def init_params(key, input_dim, hidden_dim, output_dim):
    """Deterministic init mimicking nn.Linear's U(-1/sqrt(fan_in), 1/sqrt(fan_in)).

    Weights are stored pre-transposed as (in_features, out_features) so the
    reference forward computes y = x @ W + b (== PyTorch's x @ W.T + b).
    """
    dims = [(input_dim, hidden_dim),
            (hidden_dim, hidden_dim),
            (hidden_dim, hidden_dim),
            (hidden_dim, hidden_dim),
            (hidden_dim, output_dim)]
    params = {}
    for i, (fan_in, fan_out) in enumerate(dims, start=1):
        key, kw, kb = jax.random.split(key, 3)
        bound = 1.0 / jnp.sqrt(jnp.float32(fan_in))
        params[f"w{i}"] = jax.random.uniform(
            kw, (fan_in, fan_out), jnp.float32, minval=-bound, maxval=bound)
        params[f"b{i}"] = jax.random.uniform(
            kb, (1, fan_out), jnp.float32, minval=-bound, maxval=bound)
    return params


def polynet_ref(x, params):
    """Pure-JAX reference for correctness checking."""
    h = jnp.tanh(x @ params["w1"] + params["b1"])
    h = jnp.tanh(h @ params["w2"] + params["b2"])
    h = jnp.tanh(h @ params["w3"] + params["b3"])
    h = jnp.tanh(h @ params["w4"] + params["b4"])
    return h @ params["w5"] + params["b5"]


if __name__ == "__main__":
    input_dim, hidden_dim, output_dim = 1, 32, 1
    samples = 64  # full linspace dataset from the original script

    key = jax.random.PRNGKey(0)
    params = init_params(key, input_dim, hidden_dim, output_dim)
    packed = pack_params(params)

    # Inputs: the 64 points in [-5, 5], shaped (64, 1) like the PyTorch data.
    x = jnp.linspace(-5.0, 5.0, samples, dtype=jnp.float32).reshape(samples, input_dim)

    out = jax.jit(polynet_forward)(x, packed)
    out = jax.block_until_ready(out)

    ref = polynet_ref(x, params)
    assert out.shape == (samples, output_dim)
    assert jnp.allclose(out, ref, atol=1e-4, rtol=1e-4), float(jnp.max(jnp.abs(out - ref)))

    print("KERNEL_OK")
</pallas_src>

<mosaic_0001>
module attributes {stable_mosaic.version = 11 : i64} {
  func.func @polynet_kernel(%arg0: memref<1x64xf32, #tpu.memory_space<vmem>>, %arg1: memref<136x40xf32, #tpu.memory_space<vmem>>, %arg2: memref<1x64xf32, #tpu.memory_space<vmem>>) attributes {dimension_semantics = [], scalar_prefetch = 0 : i64, scratch_operands = 0 : i64, tpu.core_type = #tpu.core_type<tc>} {
    %cst = arith.constant 1.000000e+00 : f32
    %0 = vector.broadcast %cst : f32 to vector<1x64xf32>
    %cst_0 = arith.constant 0.000000e+00 : f32
    %1 = vector.broadcast %cst_0 : f32 to vector<7x64xf32>
    %2 = tpu.concatenate %0, %1 in 0 : vector<1x64xf32>, vector<7x64xf32> -> vector<8x64xf32>
    %c0 = arith.constant 0 : index
    %c0_1 = arith.constant 0 : index
    %3 = vector.load %arg0[%c0, %c0_1] : memref<1x64xf32, #tpu.memory_space<vmem>>, vector<1x64xf32>
    %cst_2 = arith.constant 0.000000e+00 : f32
    %4 = vector.broadcast %cst_2 : f32 to vector<38x64xf32>
    %5 = tpu.concatenate %3, %0, %4 in 0 : vector<1x64xf32>, vector<1x64xf32>, vector<38x64xf32> -> vector<40x64xf32>
    %c0_3 = arith.constant 0 : index
    %c0_4 = arith.constant 0 : index
    %6 = vector.load %arg1[%c0_3, %c0_4] : memref<136x40xf32, #tpu.memory_space<vmem>>, vector<32x40xf32>
    %cst_5 = arith.constant dense<0.000000e+00> : vector<32x64xf32>
    %7 = tpu.matmul %6, %5, %cst_5 {dimension_numbers = #tpu.dot_dimension_numbers<[1], [0], [0], [1], [0, 0, 1, 1], [], []>} : vector<32x40xf32>, vector<40x64xf32>, vector<32x64xf32> -> vector<32x64xf32>
    %8 = math.tanh %7 : vector<32x64xf32>
    %c32 = arith.constant 32 : index
    %c0_6 = arith.constant 0 : index
    %9 = vector.load %arg1[%c32, %c0_6] : memref<136x40xf32, #tpu.memory_space<vmem>>, vector<32x40xf32>
    %10 = tpu.concatenate %8, %2 in 0 : vector<32x64xf32>, vector<8x64xf32> -> vector<40x64xf32>
    %cst_7 = arith.constant dense<0.000000e+00> : vector<32x64xf32>
    %11 = tpu.matmul %9, %10, %cst_7 {dimension_numbers = #tpu.dot_dimension_numbers<[1], [0], [0], [1], [0, 0, 1, 1], [], []>} : vector<32x40xf32>, vector<40x64xf32>, vector<32x64xf32> -> vector<32x64xf32>
    %12 = math.tanh %11 : vector<32x64xf32>
    %c64 = arith.constant 64 : index
    %c0_8 = arith.constant 0 : index
    %13 = vector.load %arg1[%c64, %c0_8] : memref<136x40xf32, #tpu.memory_space<vmem>>, vector<32x40xf32>
    %14 = tpu.concatenate %12, %2 in 0 : vector<32x64xf32>, vector<8x64xf32> -> vector<40x64xf32>
    %cst_9 = arith.constant dense<0.000000e+00> : vector<32x64xf32>
    %15 = tpu.matmul %13, %14, %cst_9 {dimension_numbers = #tpu.dot_dimension_numbers<[1], [0], [0], [1], [0, 0, 1, 1], [], []>} : vector<32x40xf32>, vector<40x64xf32>, vector<32x64xf32> -> vector<32x64xf32>
    %16 = math.tanh %15 : vector<32x64xf32>
    %c96 = arith.constant 96 : index
    %c0_10 = arith.constant 0 : index
    %17 = vector.load %arg1[%c96, %c0_10] : memref<136x40xf32, #tpu.memory_space<vmem>>, vector<32x40xf32>
    %18 = tpu.concatenate %16, %2 in 0 : vector<32x64xf32>, vector<8x64xf32> -> vector<40x64xf32>
    %cst_11 = arith.constant dense<0.000000e+00> : vector<32x64xf32>
    %19 = tpu.matmul %17, %18, %cst_11 {dimension_numbers = #tpu.dot_dimension_numbers<[1], [0], [0], [1], [0, 0, 1, 1], [], []>} : vector<32x40xf32>, vector<40x64xf32>, vector<32x64xf32> -> vector<32x64xf32>
    %20 = math.tanh %19 : vector<32x64xf32>
    %c128 = arith.constant 128 : index
    %c0_12 = arith.constant 0 : index
    %21 = vector.load %arg1[%c128, %c0_12] : memref<136x40xf32, #tpu.memory_space<vmem>>, vector<8x40xf32>
    %22 = tpu.concatenate %20, %2 in 0 : vector<32x64xf32>, vector<8x64xf32> -> vector<40x64xf32>
    %cst_13 = arith.constant dense<0.000000e+00> : vector<8x64xf32>
    %23 = tpu.matmul %21, %22, %cst_13 {dimension_numbers = #tpu.dot_dimension_numbers<[1], [0], [0], [1], [0, 0, 1, 1], [], []>} : vector<8x40xf32>, vector<40x64xf32>, vector<8x64xf32> -> vector<8x64xf32>
    %24 = vector.extract_strided_slice %23 {offsets = [0, 0], sizes = [1, 64], strides = [1, 1]} : vector<8x64xf32> to vector<1x64xf32>
    %c0_14 = arith.constant 0 : index
    %c0_15 = arith.constant 0 : index
    %25 = vector.load %arg2[%c0_14, %c0_15] : memref<1x64xf32, #tpu.memory_space<vmem>>, vector<1x64xf32>
    tpu.vector_store %arg2[%c0_14, %c0_15], %24 {strides = array<i32>} : memref<1x64xf32, #tpu.memory_space<vmem>>, vector<1x64xf32>,
    return
  }
}

</mosaic_0001>

<llo_original>
// kernel: polynet_forward.1
$region0: #{polynet_forward.1}
  #allocation0 [shape = 'u32[]', space=smem, size = 0x4, offset = 0x4, fixed_abs, tag = 'smem constant byte address 0x4 - core index']
  #allocation1 [shape = 'u32[144,128]{1,0:T(1,128)}', space=vmem, size = 0x12000, scoped, tag = 'internal scratch']
  %s0 = inlined_call_operand.vmem [shape: f32[1,64], index: 0, kind: input, shape index: {}]
  %s1 = inlined_call_operand.vmem [shape: f32[136,40], index: 1, kind: input, shape index: {}]
  %s2 = inlined_call_operand.hbm [shape: f32[1,64], index: 2, kind: output, shape index: {}]
  %s3 = sld [smem:[#allocation0]]
  $region18: #{polynet_forward.1} parent=0
    _
  %s5 = ssub.s32 1, %s3
  %s6 = scalar_select 0, %s5, %s3
  $region1: #{polynet_forward.1} parent=0
    #allocation2 [shape = 'u8[512]{0}', space=vmem, size = 0x400, scoped, tag = 'output window, operand 0, single buffered']
    #allocation3 [shape = 's32[1]{0}', space=sflag, size = 0x4, scoped, tag = 'scoped memory for polynet_forward.1']
    %7 = vsyncpa [#allocation3], 0
    // Predicated region
    $region2: #{polynet_forward.1} parent=1 // pred_check
      _
    $region3: #{polynet_forward.1} parent=1 // pred_check_branch
      %9 = sbr.rel (0) target = $region5
    $region4: #{polynet_forward.1} parent=1 // pred_region
      _
    $region5: #{polynet_forward.1} parent=1 // pred_fallthru
      _
    // Predicated region
    $region6: #{polynet_forward.1} parent=1 // pred_check
      _
    $region7: #{polynet_forward.1} parent=1 // pred_check_branch
      %11 = sbr.rel (0) target = $region9
    $region8: #{polynet_forward.1} parent=1 // pred_region
      _
    $region9: #{polynet_forward.1} parent=1 // pred_fallthru
      _
    %vm12 = vcmask 1040384
    %v13 = vsel %vm12, 1.0, 0.0
    %v14 = vld [vmem:[%s0] sm:$0x1]
    %v15 = vsel %vm12, %v14, 1.0
    %vm16 = vcmask 1041408
    %v17 = vsel %vm16, %v15, 0.0
    %v18 = vld [vmem:[%s1] sm:$0xff]
    %v19 = vld [vmem:[%s1 + $0x8] sm:$0xff]
    %v20 = vld [vmem:[%s1 + $0x10] sm:$0xff]
    %v21 = vld [vmem:[%s1 + $0x18] sm:$0xff]
    %vm22 = vcmask 326656
    %v24 = vsel %vm22, %v18, 0
    %v27 = vsel %vm22, %v19, 0
    %v30 = vsel %vm22, %v20, 0
    %v33 = vsel %vm22, %v21, 0
    %35 = vmatprep.subr.mxu0 0.0
    %36 = vmatpush1.msra.mxu0 %v17
    %37 = vmatprep.subr.mxu0 0.0
    %38 = vmatpush1.msra.mxu0 0.0
    %39 = vmatprep.subr.mxu0 0.0
    %40 = vmatpush1.msra.mxu0 0.0
    %41 = vmatprep.subr.mxu0 0.0
    %42 = vmatpush1.msra.mxu0 0.0
    %43 = vmatprep.subr.mxu0 0.0
    %44 = vmatpush1.msra.mxu0 0.0
    %45 = vmatprep.subr.mxu0 0.0
    %46 = vmatpush1.msra.mxu0 0.0
    %47 = vmatprep.subr.mxu0 0.0
    %48 = vmatpush1.msra.mxu0 0.0
    %49 = vmatprep.subr.mxu0 0.0
    %50 = vmatpush1.msra.mxu0 0.0
    %51 = vmatprep.subr.mxu0 0.0
    %52 = vmatpush1.msra.mxu0 0.0
    %53 = vmatprep.subr.mxu0 0.0
    %54 = vmatpush1.msra.mxu0 0.0
    %55 = vmatprep.subr.mxu0 0.0
    %56 = vmatpush1.msra.mxu0 0.0
    %57 = vmatprep.subr.mxu0 0.0
    %58 = vmatpush1.msra.mxu0 0.0
    %59 = vmatprep.subr.mxu0 0.0
    %60 = vmatpush1.msra.mxu0 0.0
    %61 = vmatprep.subr.mxu0 0.0
    %62 = vmatpush1.msra.mxu0 0.0
    %63 = vmatprep.subr.mxu0 0.0
    %64 = vmatpush1.msra.mxu0 0.0
    %65 = vmatprep.subr.mxu0 0.0
    %66 = vmatpush1.msra.mxu0 0.0
    %67 = vmatprep.subr.mxu0 0.0
    %68 = vmatpush1.msra.mxu0 0.0
    %69 = vmatprep.subr.mxu0 0.0
    %70 = vmatpush1.msra.mxu0 0.0
    %71 = vmatprep.subr.mxu0 0.0
    %72 = vmatpush1.msra.mxu0 0.0
    %73 = vmatprep.subr.mxu0 0.0
    %74 = vmatpush1.msra.mxu0 0.0
    %75 = vmatprep.subr.mxu0 0.0
    %76 = vmatpush1.msra.mxu0 0.0
    %77 = vmatprep.subr.mxu0 0.0
    %78 = vmatpush1.msra.mxu0 0.0
    %79 = vmatprep.subr.mxu0 0.0
    %80 = vmatpush1.msra.mxu0 0.0
    %81 = vmatprep.subr.mxu0 0.0
    %82 = vmatpush1.msra.mxu0 0.0
    %83 = vmatprep.subr.mxu0 0.0
    %84 = vmatpush1.msra.mxu0 0.0
    %85 = vmatprep.subr.mxu0 0.0
    %86 = vmatpush1.msra.mxu0 0.0
    %87 = vmatprep.subr.mxu0 0.0
    %88 = vmatpush1.msra.mxu0 0.0
    %89 = vmatprep.subr.mxu0 0.0
    %90 = vmatpush1.msra.mxu0 0.0
    %91 = vmatprep.subr.mxu0 0.0
    %92 = vmatpush1.msra.mxu0 0.0
    %93 = vmatprep.subr.mxu0 0.0
    %94 = vmatpush1.msra.mxu0 0.0
    %95 = vmatprep.subr.mxu0 0.0
    %96 = vmatpush1.msra.mxu0 0.0
    %97 = vmatprep.subr.mxu0 0.0
    %98 = vmatpush1.msra.mxu0 0.0
    %99 = vmatprep.mubr.f32.mxu0 0.0
    %100 = vmatmul.mubr.f32.gmra.mrb[0].mxu0 %v24
    %v101 = vpop.f32.mrb[0].mxu0
    %v102 = vadd.f32 0.0, %v101
    %v103 = vpop.f32.mrb[0].mxu0
    %104 = vmatprep.mubr.f32.mxu0 0.0
    %105 = vmatmul.mubr.f32.gmra.mrb[0].mxu0 %v27
    %v106 = vpop.f32.mrb[0].mxu0
    %v107 = vadd.f32 0.0, %v106
    %v108 = vpop.f32.mrb[0].mxu0
    %109 = vmatprep.mubr.f32.mxu0 0.0
    %110 = vmatmul.mubr.f32.gmra.mrb[0].mxu0 %v30
    %v111 = vpop.f32.mrb[0].mxu0
    %v112 = vadd.f32 0.0, %v111
    %v113 = vpop.f32.mrb[0].mxu0
    %114 = vmatprep.mubr.f32.mxu0 0.0
    %115 = vmatmul.mubr.f32.gmra.mrb[0].mxu0 %v33
    %v116 = vpop.f32.mrb[0].mxu0
    %v117 = vadd.f32 0.0, %v116
    %v118 = vpop.f32.mrb[0].mxu0
    %119 = vdwg.mxu0
    %v120 = vtanh.pop %v102
    %v121 = vtanh.pop %v107
    %v122 = vtanh.pop %v112
    %v123 = vtanh.pop %v117
    %v124 = vld [vmem:[%s1 + $0x20] sm:$0xff]
    %v125 = vld [vmem:[%s1 + $0x28] sm:$0xff]
    %v126 = vld [vmem:[%s1 + $0x30] sm:$0xff]
    %v127 = vld [vmem:[%s1 + $0x38] sm:$0xff]
    %v129 = vsel %vm22, %v124, 0
    %v132 = vsel %vm22, %v125, 0
    %v135 = vsel %vm22, %v126, 0
    %v138 = vsel %vm22, %v127, 0
    %140 = vmatprep.subr.mxu0 0.0
    %141 = vmatpush1.msra.mxu0 %v120
    %142 = vmatprep.subr.mxu0 0.0
    %143 = vmatpush1.msra.mxu0 %v121
    %144 = vmatprep.subr.mxu0 0.0
    %145 = vmatpush1.msra.mxu0 %v122
    %146 = vmatprep.subr.mxu0 0.0
    %147 = vmatpush1.msra.mxu0 %v123
    %148 = vmatprep.subr.mxu0 0.0
    %149 = vmatpush1.msra.mxu0 %v13
    %150 = vmatprep.subr.mxu0 0.0
    %151 = vmatpush1.msra.mxu0 0.0
    %152 = vmatprep.subr.mxu0 0.0
    %153 = vmatpush1.msra.mxu0 0.0
    %154 = vmatprep.subr.mxu0 0.0
    %155 = vmatpush1.msra.mxu0 0.0
    %156 = vmatprep.subr.mxu0 0.0
    %157 = vmatpush1.msra.mxu0 0.0
    %158 = vmatprep.subr.mxu0 0.0
    %159 = vmatpush1.msra.mxu0 0.0
    %160 = vmatprep.subr.mxu0 0.0
    %161 = vmatpush1.msra.mxu0 0.0
    %162 = vmatprep.subr.mxu0 0.0
    %163 = vmatpush1.msra.mxu0 0.0
    %164 = vmatprep.subr.mxu0 0.0
    %165 = vmatpush1.msra.mxu0 0.0
    %166 = vmatprep.subr.mxu0 0.0
    %167 = vmatpush1.msra.mxu0 0.0
    %168 = vmatprep.subr.mxu0 0.0
    %169 = vmatpush1.msra.mxu0 0.0
    %170 = vmatprep.subr.mxu0 0.0
    %171 = vmatpush1.msra.mxu0 0.0
    %172 = vmatprep.subr.mxu0 0.0
    %173 = vmatpush1.msra.mxu0 0.0
    %174 = vmatprep.subr.mxu0 0.0
    %175 = vmatpush1.msra.mxu0 0.0
    %176 = vmatprep.subr.mxu0 0.0
    %177 = vmatpush1.msra.mxu0 0.0
    %178 = vmatprep.subr.mxu0 0.0
    %179 = vmatpush1.msra.mxu0 0.0
    %180 = vmatprep.subr.mxu0 0.0
    %181 = vmatpush1.msra.mxu0 0.0
    %182 = vmatprep.subr.mxu0 0.0
    %183 = vmatpush1.msra.mxu0 0.0
    %184 = vmatprep.subr.mxu0 0.0
    %185 = vmatpush1.msra.mxu0 0.0
    %186 = vmatprep.subr.mxu0 0.0
    %187 = vmatpush1.msra.mxu0 0.0
    %188 = vmatprep.subr.mxu0 0.0
    %189 = vmatpush1.msra.mxu0 0.0
    %190 = vmatprep.subr.mxu0 0.0
    %191 = vmatpush1.msra.mxu0 0.0
    %192 = vmatprep.subr.mxu0 0.0
    %193 = vmatpush1.msra.mxu0 0.0
    %194 = vmatprep.subr.mxu0 0.0
    %195 = vmatpush1.msra.mxu0 0.0
    %196 = vmatprep.subr.mxu0 0.0
    %197 = vmatpush1.msra.mxu0 0.0
    %198 = vmatprep.subr.mxu0 0.0
    %199 = vmatpush1.msra.mxu0 0.0
    %200 = vmatprep.subr.mxu0 0.0
    %201 = vmatpush1.msra.mxu0 0.0
    %202 = vmatprep.subr.mxu0 0.0
    %203 = vmatpush1.msra.mxu0 0.0
    %204 = vmatprep.mubr.f32.mxu0 0.0
    %205 = vmatmul.mubr.f32.gmra.mrb[0].mxu0 %v129
    %v206 = vpop.f32.mrb[0].mxu0
    %v207 = vadd.f32 0.0, %v206
    %v208 = vpop.f32.mrb[0].mxu0
    %209 = vmatprep.mubr.f32.mxu0 0.0
    %210 = vmatmul.mubr.f32.gmra.mrb[0].mxu0 %v132
    %v211 = vpop.f32.mrb[0].mxu0
    %v212 = vadd.f32 0.0, %v211
    %v213 = vpop.f32.mrb[0].mxu0
    %214 = vmatprep.mubr.f32.mxu0 0.0
    %215 = vmatmul.mubr.f32.gmra.mrb[0].mxu0 %v135
    %v216 = vpop.f32.mrb[0].mxu0
    %v217 = vadd.f32 0.0, %v216
    %v218 = vpop.f32.mrb[0].mxu0
    %219 = vmatprep.mubr.f32.mxu0 0.0
    %220 = vmatmul.mubr.f32.gmra.mrb[0].mxu0 %v138
    %v221 = vpop.f32.mrb[0].mxu0
    %v222 = vadd.f32 0.0, %v221
    %v223 = vpop.f32.mrb[0].mxu0
    %224 = vdwg.mxu0
    %v225 = vtanh.pop %v207
    %v226 = vtanh.pop %v212
    %v227 = vtanh.pop %v217
    %v228 = vtanh.pop %v222
    %v229 = vld [vmem:[%s1 + $0x40] sm:$0xff]
    %v230 = vld [vmem:[%s1 + $0x48] sm:$0xff]
    %v231 = vld [vmem:[%s1 + $0x50] sm:$0xff]
    %v232 = vld [vmem:[%s1 + $0x58] sm:$0xff]
    %v234 = vsel %vm22, %v229, 0
    %v237 = vsel %vm22, %v230, 0
    %v240 = vsel %vm22, %v231, 0
    %v243 = vsel %vm22, %v232, 0
    %245 = vmatprep.subr.mxu0 0.0
    %246 = vmatpush1.msra.mxu0 %v225
    %247 = vmatprep.subr.mxu0 0.0
    %248 = vmatpush1.msra.mxu0 %v226
    %249 = vmatprep.subr.mxu0 0.0
    %250 = vmatpush1.msra.mxu0 %v227
    %251 = vmatprep.subr.mxu0 0.0
    %252 = vmatpush1.msra.mxu0 %v228
    %253 = vmatprep.subr.mxu0 0.0
    %254 = vmatpush1.msra.mxu0 %v13
    %255 = vmatprep.subr.mxu0 0.0
    %256 = vmatpush1.msra.mxu0 0.0
    %257 = vmatprep.subr.mxu0 0.0
    %258 = vmatpush1.msra.mxu0 0.0
    %259 = vmatprep.subr.mxu0 0.0
    %260 = vmatpush1.msra.mxu0 0.0
    %261 = vmatprep.subr.mxu0 0.0
    %262 = vmatpush1.msra.mxu0 0.0
    %263 = vmatprep.subr.mxu0 0.0
    %264 = vmatpush1.msra.mxu0 0.0
    %265 = vmatprep.subr.mxu0 0.0
    %266 = vmatpush1.msra.mxu0 0.0
    %267 = vmatprep.subr.mxu0 0.0
    %268 = vmatpush1.msra.mxu0 0.0
    %269 = vmatprep.subr.mxu0 0.0
    %270 = vmatpush1.msra.mxu0 0.0
    %271 = vmatprep.subr.mxu0 0.0
    %272 = vmatpush1.msra.mxu0 0.0
    %273 = vmatprep.subr.mxu0 0.0
    %274 = vmatpush1.msra.mxu0 0.0
    %275 = vmatprep.subr.mxu0 0.0
    %276 = vmatpush1.msra.mxu0 0.0
    %277 = vmatprep.subr.mxu0 0.0
    %278 = vmatpush1.msra.mxu0 0.0
    %279 = vmatprep.subr.mxu0 0.0
    %280 = vmatpush1.msra.mxu0 0.0
    %281 = vmatprep.subr.mxu0 0.0
    %282 = vmatpush1.msra.mxu0 0.0
    %283 = vmatprep.subr.mxu0 0.0
    %284 = vmatpush1.msra.mxu0 0.0
    %285 = vmatprep.subr.mxu0 0.0
    %286 = vmatpush1.msra.mxu0 0.0
    %287 = vmatprep.subr.mxu0 0.0
    %288 = vmatpush1.msra.mxu0 0.0
    %289 = vmatprep.subr.mxu0 0.0
    %290 = vmatpush1.msra.mxu0 0.0
    %291 = vmatprep.subr.mxu0 0.0
    %292 = vmatpush1.msra.mxu0 0.0
    %293 = vmatprep.subr.mxu0 0.0
    %294 = vmatpush1.msra.mxu0 0.0
    %295 = vmatprep.subr.mxu0 0.0
    %296 = vmatpush1.msra.mxu0 0.0
    %297 = vmatprep.subr.mxu0 0.0
    %298 = vmatpush1.msra.mxu0 0.0
    %299 = vmatprep.subr.mxu0 0.0
    %300 = vmatpush1.msra.mxu0 0.0
    %301 = vmatprep.subr.mxu0 0.0
    %302 = vmatpush1.msra.mxu0 0.0
    %303 = vmatprep.subr.mxu0 0.0
    %304 = vmatpush1.msra.mxu0 0.0
    %305 = vmatprep.subr.mxu0 0.0
    %306 = vmatpush1.msra.mxu0 0.0
    %307 = vmatprep.subr.mxu0 0.0
    %308 = vmatpush1.msra.mxu0 0.0
    %309 = vmatprep.mubr.f32.mxu0 0.0
    %310 = vmatmul.mubr.f32.gmra.mrb[0].mxu0 %v234
    %v311 = vpop.f32.mrb[0].mxu0
    %v312 = vadd.f32 0.0, %v311
    %v313 = vpop.f32.mrb[0].mxu0
    %314 = vmatprep.mubr.f32.mxu0 0.0
    %315 = vmatmul.mubr.f32.gmra.mrb[0].mxu0 %v237
    %v316 = vpop.f32.mrb[0].mxu0
    %v317 = vadd.f32 0.0, %v316
    %v318 = vpop.f32.mrb[0].mxu0
    %319 = vmatprep.mubr.f32.mxu0 0.0
    %320 = vmatmul.mubr.f32.gmra.mrb[0].mxu0 %v240
    %v321 = vpop.f32.mrb[0].mxu0
    %v322 = vadd.f32 0.0, %v321
    %v323 = vpop.f32.mrb[0].mxu0
    %324 = vmatprep.mubr.f32.mxu0 0.0
    %325 = vmatmul.mubr.f32.gmra.mrb[0].mxu0 %v243
    %v326 = vpop.f32.mrb[0].mxu0
    %v327 = vadd.f32 0.0, %v326
    %v328 = vpop.f32.mrb[0].mxu0
    %329 = vdwg.mxu0
    %v330 = vtanh.pop %v312
    %v331 = vtanh.pop %v317
    %v332 = vtanh.pop %v322
    %v333 = vtanh.pop %v327
    %v334 = vld [vmem:[%s1 + $0x60] sm:$0xff]
    %v335 = vld [vmem:[%s1 + $0x68] sm:$0xff]
    %v336 = vld [vmem:[%s1 + $0x70] sm:$0xff]
    %v337 = vld [vmem:[%s1 + $0x78] sm:$0xff]
    %v339 = vsel %vm22, %v334, 0
    %v342 = vsel %vm22, %v335, 0
    %v345 = vsel %vm22, %v336, 0
    %v348 = vsel %vm22, %v337, 0
    %350 = vmatprep.subr.mxu0 0.0
    %351 = vmatpush1.msra.mxu0 %v330
    %352 = vmatprep.subr.mxu0 0.0
    %353 = vmatpush1.msra.mxu0 %v331
    %354 = vmatprep.subr.mxu0 0.0
    %355 = vmatpush1.msra.mxu0 %v332
    %356 = vmatprep.subr.mxu0 0.0
    %357 = vmatpush1.msra.mxu0 %v333
    %358 = vmatprep.subr.mxu0 0.0
    %359 = vmatpush1.msra.mxu0 %v13
    %360 = vmatprep.subr.mxu0 0.0
    %361 = vmatpush1.msra.mxu0 0.0
    %362 = vmatprep.subr.mxu0 0.0
    %363 = vmatpush1.msra.mxu0 0.0
    %364 = vmatprep.subr.mxu0 0.0
    %365 = vmatpush1.msra.mxu0 0.0
    %366 = vmatprep.subr.mxu0 0.0
    %367 = vmatpush1.msra.mxu0 0.0
    %368 = vmatprep.subr.mxu0 0.0
    %369 = vmatpush1.msra.mxu0 0.0
    %370 = vmatprep.subr.mxu0 0.0
    %371 = vmatpush1.msra.mxu0 0.0
    %372 = vmatprep.subr.mxu0 0.0
    %373 = vmatpush1.msra.mxu0 0.0
    %374 = vmatprep.subr.mxu0 0.0
    %375 = vmatpush1.msra.mxu0 0.0
    %376 = vmatprep.subr.mxu0 0.0
    %377 = vmatpush1.msra.mxu0 0.0
    %378 = vmatprep.subr.mxu0 0.0
    %379 = vmatpush1.msra.mxu0 0.0
    %380 = vmatprep.subr.mxu0 0.0
    %381 = vmatpush1.msra.mxu0 0.0
    %382 = vmatprep.subr.mxu0 0.0
    %383 = vmatpush1.msra.mxu0 0.0
    %384 = vmatprep.subr.mxu0 0.0
    %385 = vmatpush1.msra.mxu0 0.0
    %386 = vmatprep.subr.mxu0 0.0
    %387 = vmatpush1.msra.mxu0 0.0
    %388 = vmatprep.subr.mxu0 0.0
    %389 = vmatpush1.msra.mxu0 0.0
    %390 = vmatprep.subr.mxu0 0.0
    %391 = vmatpush1.msra.mxu0 0.0
    %392 = vmatprep.subr.mxu0 0.0
    %393 = vmatpush1.msra.mxu0 0.0
    %394 = vmatprep.subr.mxu0 0.0
    %395 = vmatpush1.msra.mxu0 0.0
    %396 = vmatprep.subr.mxu0 0.0
    %397 = vmatpush1.msra.mxu0 0.0
    %398 = vmatprep.subr.mxu0 0.0
    %399 = vmatpush1.msra.mxu0 0.0
    %400 = vmatprep.subr.mxu0 0.0
    %401 = vmatpush1.msra.mxu0 0.0
    %402 = vmatprep.subr.mxu0 0.0
    %403 = vmatpush1.msra.mxu0 0.0
    %404 = vmatprep.subr.mxu0 0.0
    %405 = vmatpush1.msra.mxu0 0.0
    %406 = vmatprep.subr.mxu0 0.0
    %407 = vmatpush1.msra.mxu0 0.0
    %408 = vmatprep.subr.mxu0 0.0
    %409 = vmatpush1.msra.mxu0 0.0
    %410 = vmatprep.subr.mxu0 0.0
    %411 = vmatpush1.msra.mxu0 0.0
    %412 = vmatprep.subr.mxu0 0.0
    %413 = vmatpush1.msra.mxu0 0.0
    %414 = vmatprep.mubr.f32.mxu0 0.0
    %415 = vmatmul.mubr.f32.gmra.mrb[0].mxu0 %v339
    %v416 = vpop.f32.mrb[0].mxu0
    %v417 = vadd.f32 0.0, %v416
    %v418 = vpop.f32.mrb[0].mxu0
    %419 = vmatprep.mubr.f32.mxu0 0.0
    %420 = vmatmul.mubr.f32.gmra.mrb[0].mxu0 %v342
    %v421 = vpop.f32.mrb[0].mxu0
    %v422 = vadd.f32 0.0, %v421
    %v423 = vpop.f32.mrb[0].mxu0
    %424 = vmatprep.mubr.f32.mxu0 0.0
    %425 = vmatmul.mubr.f32.gmra.mrb[0].mxu0 %v345
    %v426 = vpop.f32.mrb[0].mxu0
    %v427 = vadd.f32 0.0, %v426
    %v428 = vpop.f32.mrb[0].mxu0
    %429 = vmatprep.mubr.f32.mxu0 0.0
    %430 = vmatmul.mubr.f32.gmra.mrb[0].mxu0 %v348
    %v431 = vpop.f32.mrb[0].mxu0
    %v432 = vadd.f32 0.0, %v431
    %v433 = vpop.f32.mrb[0].mxu0
    %434 = vdwg.mxu0
    %v435 = vtanh.pop %v417
    %v436 = vtanh.pop %v422
    %v437 = vtanh.pop %v427
    %v438 = vtanh.pop %v432
    %v439 = vld [vmem:[%s1 + $0x80] sm:$0xff]
    %v441 = vsel %vm22, %v439, 0
    %443 = vmatprep.subr.mxu0 0.0
    %444 = vmatpush1.msra.mxu0 %v435
    %445 = vmatprep.subr.mxu0 0.0
    %446 = vmatpush1.msra.mxu0 %v436
    %447 = vmatprep.subr.mxu0 0.0
    %448 = vmatpush1.msra.mxu0 %v437
    %449 = vmatprep.subr.mxu0 0.0
    %450 = vmatpush1.msra.mxu0 %v438
    %451 = vmatprep.subr.mxu0 0.0
    %452 = vmatpush1.msra.mxu0 %v13
    %453 = vmatprep.subr.mxu0 0.0
    %454 = vmatpush1.msra.mxu0 0.0
    %455 = vmatprep.subr.mxu0 0.0
    %456 = vmatpush1.msra.mxu0 0.0
    %457 = vmatprep.subr.mxu0 0.0
    %458 = vmatpush1.msra.mxu0 0.0
    %459 = vmatprep.subr.mxu0 0.0
    %460 = vmatpush1.msra.mxu0 0.0
    %461 = vmatprep.subr.mxu0 0.0
    %462 = vmatpush1.msra.mxu0 0.0
    %463 = vmatprep.subr.mxu0 0.0
    %464 = vmatpush1.msra.mxu0 0.0
    %465 = vmatprep.subr.mxu0 0.0
    %466 = vmatpush1.msra.mxu0 0.0
    %467 = vmatprep.subr.mxu0 0.0
    %468 = vmatpush1.msra.mxu0 0.0
    %469 = vmatprep.subr.mxu0 0.0
    %470 = vmatpush1.msra.mxu0 0.0
    %471 = vmatprep.subr.mxu0 0.0
    %472 = vmatpush1.msra.mxu0 0.0
    %473 = vmatprep.subr.mxu0 0.0
    %474 = vmatpush1.msra.mxu0 0.0
    %475 = vmatprep.subr.mxu0 0.0
    %476 = vmatpush1.msra.mxu0 0.0
    %477 = vmatprep.subr.mxu0 0.0
    %478 = vmatpush1.msra.mxu0 0.0
    %479 = vmatprep.subr.mxu0 0.0
    %480 = vmatpush1.msra.mxu0 0.0
    %481 = vmatprep.subr.mxu0 0.0
    %482 = vmatpush1.msra.mxu0 0.0
    %483 = vmatprep.subr.mxu0 0.0
    %484 = vmatpush1.msra.mxu0 0.0
    %485 = vmatprep.subr.mxu0 0.0
    %486 = vmatpush1.msra.mxu0 0.0
    %487 = vmatprep.subr.mxu0 0.0
    %488 = vmatpush1.msra.mxu0 0.0
    %489 = vmatprep.subr.mxu0 0.0
    %490 = vmatpush1.msra.mxu0 0.0
    %491 = vmatprep.subr.mxu0 0.0
    %492 = vmatpush1.msra.mxu0 0.0
    %493 = vmatprep.subr.mxu0 0.0
    %494 = vmatpush1.msra.mxu0 0.0
    %495 = vmatprep.subr.mxu0 0.0
    %496 = vmatpush1.msra.mxu0 0.0
    %497 = vmatprep.subr.mxu0 0.0
    %498 = vmatpush1.msra.mxu0 0.0
    %499 = vmatprep.subr.mxu0 0.0
    %500 = vmatpush1.msra.mxu0 0.0
    %501 = vmatprep.subr.mxu0 0.0
    %502 = vmatpush1.msra.mxu0 0.0
    %503 = vmatprep.subr.mxu0 0.0
    %504 = vmatpush1.msra.mxu0 0.0
    %505 = vmatprep.subr.mxu0 0.0
    %506 = vmatpush1.msra.mxu0 0.0
    %507 = vmatprep.mubr.f32.mxu0 0.0
    %508 = vmatmul.mubr.f32.gmra.mrb[0].mxu0 %v441
    %v509 = vpop.f32.mrb[0].mxu0
    %v510 = vadd.f32 0.0, %v509
    %v511 = vpop.f32.mrb[0].mxu0
    %512 = vdwg.mxu0
    %vm513 = vcmask 516096
    %514 = vst.msk [vmem:[#allocation2] sm:$0x1] %vm513, %v510
    // Predicated region
    $region10: #{polynet_forward.1} parent=1 // pred_check
      _
    $region11: #{polynet_forward.1} parent=1 // pred_check_branch
      %516 = sbr.rel (0) target = $region13
    $region12: #{polynet_forward.1} parent=1 // pred_region
      %s518 = ssub.s32 16, 16
      %519 = vsyncadd [#allocation3], %s518
      %s521 = sshll.u32 [#allocation2], 4
      %s522 = int_to_ptr.vmem [resolvable:$true] %s521
      %524 = dma.vmem_to_hbm [thread:$0]  %s522, 16, %s2, [#allocation3]
    $region13: #{polynet_forward.1} parent=1 // pred_fallthru
      _
    // Predicated region
    $region14: #{polynet_forward.1} parent=1 // pred_check
      _
    $region15: #{polynet_forward.1} parent=1 // pred_check_branch
      %526 = sbr.rel (0) target = $region17
    $region16: #{polynet_forward.1} parent=1 // pred_region
      %527 = dma.done [#allocation3], 16
    $region17: #{polynet_forward.1} parent=1 // pred_fallthru
      _
    %528 = vsyncpa [#allocation3], 1

</llo_original>
